<compile_context>
chip_gen: v7x
topology: tpu7x:2x2x1
jax: 0.10.0
libtpu: 0.0.40
codegen_flags: <defaults>
</compile_context>

<pallas_src>
import functools

import numpy as np
import jax
import jax.numpy as jnp
from jax import lax
from jax.experimental import pallas as pl
from jax.experimental.pallas import tpu as pltpu


_VMEM_LIMIT = 32 * 1024 * 1024   # modest; fits v5e/v6e/v7x scoped VMEM easily


# ----------------------------------------------------------------------------
# Pallas kernels
# ----------------------------------------------------------------------------
def _conv_tap_kernel(x_ref, w_ref, b_ref, o_ref, *, taps, cin, ho, wo, wq,
                     slope, apply_act):
    """Fused conv2d for one batch element.

    x_ref : (1, P, Cin, F)        parity-plane-split, flattened padded image
    w_ref : (T, Cout, Cin)        per-tap weight slabs (resident)
    b_ref : (Cout, 1)             bias (resident, f32)
    o_ref : (1, Cout, Ho*Wo)      output block
    Every tap is a contiguous lane window of length Ho*Wq of its plane; the
    KW-1 "wrap" columns per row are garbage and sliced off at the end.
    """
    cout = o_ref.shape[1]
    L = ho * wq
    if cin == 1:
        # First layer: stack the (few) taps in VMEM and use one MXU dot.
        a = jnp.concatenate(
            [x_ref[0, p, :, pl.ds(s, L)] for (p, s) in taps], axis=0)   # (T, L)
        w_all = w_ref[:, :, 0]                                          # (T, Cout)
        acc = lax.dot_general(w_all, a, (((0,), (0,)), ((), ())),
                              preferred_element_type=jnp.float32)       # (Cout, L)
    else:
        acc = jnp.zeros((cout, L), jnp.float32)
        for t, (p, s) in enumerate(taps):
            aw = x_ref[0, p, :, pl.ds(s, L)]                            # (Cin, L)
            acc = acc + jnp.dot(w_ref[t], aw,
                                preferred_element_type=jnp.float32)
    acc = acc + b_ref[...]                                              # (Cout,1) bcast
    if apply_act:
        acc = jnp.where(acc >= 0, acc, acc * slope)
    val = acc.reshape(cout, ho, wq)[:, :, :wo].reshape(cout, ho * wo)
    o_ref[0] = val.astype(o_ref.dtype)


def _stft_mag_kernel(segT_ref, dft_ref, o_ref, *, r, n_frames, nbp, n_bins):
    """|STFT| for one batch element, directly in (n_bins, n_frames) layout.

    segT_ref : (1, seg, n_seg)   non-overlapping signal segments, transposed
    dft_ref  : (r, 2*nbp, seg)   [cos ; sin] DFT chunks (window folded in)
    o_ref    : (1, n_bins, n_frames)
    """
    acc = jnp.zeros((2 * nbp, n_frames), jnp.float32)
    for s in range(r):
        a = segT_ref[0, :, pl.ds(s, n_frames)]              # (seg, n_frames)
        acc = acc + jnp.dot(dft_ref[s], a,
                            preferred_element_type=jnp.float32)
    re = acc[:nbp]
    im = acc[nbp:]
    mag = jnp.sqrt(re * re + im * im)                        # matches torch .abs()
    o_ref[0] = mag[:n_bins].astype(o_ref.dtype)


# ----------------------------------------------------------------------------
# Pallas wrappers
# ----------------------------------------------------------------------------
def conv2d_fused(x, weight, bias, stride, padding, *, slope=0.1, apply_act=True,
                 compute_dtype=jnp.bfloat16, out_dtype=None):
    """Conv2d (NCHW in / NCHW out) + bias + optional leaky-relu, fused im2col."""
    if out_dtype is None:
        out_dtype = compute_dtype
    B, Cin, H, W = x.shape
    Cout, Cin2, KH, KW = weight.shape
    assert Cin2 == Cin
    sh, sw = stride
    ph, pw = padding
    Ho = (H + 2 * ph - KH) // sh + 1
    Wo = (W + 2 * pw - KW) // sw + 1
    assert Ho > 0 and Wo > 0

    # Parity-plane geometry (strides are 1 or 2): plane (i % sh, j % sw).
    Hq = (KH - 1) // sh + Ho
    Wq = (KW - 1) // sw + Wo
    Hpad = sh * Hq
    Wpad = sw * Wq
    P = sh * sw

    # TODO(synk): pad/plane-split/cast still run as XLA ops (~2x input HBM
    # traffic); a halo-DMA producer inside the kernel would remove even that.
    xq = jnp.pad(x, ((0, 0), (0, 0), (ph, Hpad - H - ph), (pw, Wpad - W - pw)))
    planes = [xq[:, :, i::sh, j::sw] for i in range(sh) for j in range(sw)]
    xq = jnp.stack(planes, axis=1)                          # (B, P, Cin, Hq, Wq)
    F = Hq * Wq + Wq                                        # +1 zero row: window overrun
    xq = jnp.pad(xq.reshape(B, P, Cin, Hq * Wq),
                 ((0, 0), (0, 0), (0, 0), (0, Wq))).astype(compute_dtype)

    taps = []
    for kh in range(KH):
        for kw in range(KW):
            p = (kh % sh) * sw + (kw % sw)
            taps.append((p, (kh // sh) * Wq + (kw // sw)))
    T = KH * KW

    Cout_p = ((Cout + 7) // 8) * 8
    w_taps = jnp.transpose(weight, (2, 3, 0, 1)).reshape(T, Cout, Cin)
    if Cout_p != Cout:
        w_taps = jnp.pad(w_taps, ((0, 0), (0, Cout_p - Cout), (0, 0)))
    w_taps = w_taps.astype(compute_dtype)
    b_col = jnp.pad(bias.astype(jnp.float32), (0, Cout_p - Cout)).reshape(Cout_p, 1)

    kernel = functools.partial(_conv_tap_kernel, taps=tuple(taps), cin=Cin,
                               ho=Ho, wo=Wo, wq=Wq, slope=slope,
                               apply_act=apply_act)
    out = pl.pallas_call(
        kernel,
        out_shape=jax.ShapeDtypeStruct((B, Cout_p, Ho * Wo), out_dtype),
        grid=(B,),
        in_specs=[
            pl.BlockSpec((1, P, Cin, F), lambda b: (b, 0, 0, 0)),
            pl.BlockSpec((T, Cout_p, Cin), lambda b: (0, 0, 0)),   # resident
            pl.BlockSpec((Cout_p, 1), lambda b: (0, 0)),           # resident
        ],
        out_specs=pl.BlockSpec((1, Cout_p, Ho * Wo), lambda b: (b, 0, 0)),
        compiler_params=pltpu.CompilerParams(
            dimension_semantics=("parallel",),
            vmem_limit_bytes=_VMEM_LIMIT),
    )(xq, w_taps, b_col)
    # TODO(synk): for very long signals Ho*Wq may need an extra grid tile axis.
    return out[:, :Cout, :].reshape(B, Cout, Ho, Wo)


def stft_magnitude(x, n_fft, hop_length, win_length, *,
                   compute_dtype=jnp.bfloat16, out_dtype=None):
    """|torch.stft(x, window=None, center=True)| -> (B, n_bins, n_frames)."""
    if out_dtype is None:
        out_dtype = compute_dtype
    B, T = x.shape
    pad = n_fft // 2
    xp = jnp.pad(x, ((0, 0), (pad, pad)), mode="reflect")     # torch center pad
    Tp = xp.shape[1]
    n_frames = 1 + (Tp - n_fft) // hop_length

    if n_fft % hop_length == 0:
        seg, r = hop_length, n_fft // hop_length
    else:
        # TODO(synk): general hop; fall back to a materialized frame matrix.
        seg, r = n_fft, 1

    n_bins = n_fft // 2 + 1
    nbp = ((n_bins + 7) // 8) * 8

    # window=None -> rectangular window of length win_length centered in n_fft.
    window = np.zeros(n_fft, np.float32)
    lo = (n_fft - win_length) // 2
    window[lo:lo + win_length] = 1.0
    n = np.arange(n_fft)[None, :].astype(np.float64)
    k = np.arange(n_bins)[:, None].astype(np.float64)
    ang = 2.0 * np.pi * k * n / n_fft
    dft = np.zeros((2 * nbp, n_fft), np.float32)
    dft[:n_bins] = np.cos(ang) * window[None, :]
    dft[nbp:nbp + n_bins] = np.sin(ang) * window[None, :]
    dft = jnp.asarray(dft.reshape(2 * nbp, r, seg).transpose(1, 0, 2)
                      ).astype(compute_dtype)                 # (r, 2*nbp, seg)

    if r > 1:
        n_seg = n_frames - 1 + r
        segT = xp[:, :n_seg * seg].reshape(B, n_seg, seg).transpose(0, 2, 1)
    else:
        idx = np.arange(n_frames)[:, None] * hop_length + np.arange(n_fft)[None, :]
        segT = xp[:, idx].transpose(0, 2, 1)
        n_seg = n_frames
    segT = segT.astype(compute_dtype)                          # (B, seg, n_seg)

    kernel = functools.partial(_stft_mag_kernel, r=r, n_frames=n_frames,
                               nbp=nbp, n_bins=n_bins)
    spec = pl.pallas_call(
        kernel,
        out_shape=jax.ShapeDtypeStruct((B, n_bins, n_frames), out_dtype),
        grid=(B,),
        in_specs=[
            pl.BlockSpec((1, seg, n_seg), lambda b: (b, 0, 0)),
            pl.BlockSpec((r, 2 * nbp, seg), lambda b: (0, 0, 0)),  # resident DFT
        ],
        out_specs=pl.BlockSpec((1, n_bins, n_frames), lambda b: (b, 0, 0)),
        compiler_params=pltpu.CompilerParams(
            dimension_semantics=("parallel",),
            vmem_limit_bytes=_VMEM_LIMIT),
    )(segT, dft)
    return spec                                               # (B, n_bins, n_frames)


# ----------------------------------------------------------------------------
# DiscriminatorR / MultiResolutionDiscriminator parameters + forward
# ----------------------------------------------------------------------------
_CONV_CFGS = [
    # (kernel, stride, padding)
    ((7, 5), (2, 2), (3, 2)),
    ((5, 3), (2, 1), (2, 1)),
    ((5, 3), (2, 2), (2, 1)),
    ((3, 3), (2, 1), (1, 1)),
    ((3, 3), (2, 2), (1, 1)),
]


def init_discriminator_r(key, channels=64, in_channels=1):
    params = {"convs": []}
    cin = in_channels
    for (k, s, p) in _CONV_CFGS:
        key, wk, bk = jax.random.split(key, 3)
        fan_in = cin * k[0] * k[1]
        w = jax.random.normal(wk, (channels, cin, k[0], k[1]), jnp.float32) / np.sqrt(fan_in)
        b = jax.random.normal(bk, (channels,), jnp.float32) * 0.01
        params["convs"].append((w, b, s, p))
        cin = channels
    key, wk, bk = jax.random.split(key, 3)
    w = jax.random.normal(wk, (1, channels, 3, 3), jnp.float32) / np.sqrt(channels * 9)
    b = jax.random.normal(bk, (1,), jnp.float32) * 0.01
    params["conv_post"] = (w, b, (1, 1), (1, 1))
    return params


def discriminator_r_forward(params, resolution, x, lrelu_slope=0.1,
                            compute_dtype=jnp.bfloat16):
    """x: (B, 1, T) -> (score (B, F), fmap list of NCHW arrays)."""
    n_fft, hop, win = resolution
    xs = x[:, 0, :]                                            # squeeze(1)
    spec = stft_magnitude(xs, n_fft, hop, win, compute_dtype=compute_dtype)
    h = spec[:, None, :, :]                                    # (B, 1, nb, nt) NCHW
    fmap = []
    for (w, b, s, p) in params["convs"]:
        h = conv2d_fused(h, w, b, s, p, slope=lrelu_slope, apply_act=True,
                         compute_dtype=compute_dtype, out_dtype=compute_dtype)
        fmap.append(h)                                         # already NCHW
    w, b, s, p = params["conv_post"]
    h = conv2d_fused(h, w, b, s, p, apply_act=False,
                     compute_dtype=compute_dtype, out_dtype=jnp.float32)
    fmap.append(h)
    # TODO(synk): cond_embedding_id branch (num_embeddings is not None) not
    # implemented; module is used with num_embeddings=None so h_cond = 0.
    out = h.reshape(h.shape[0], -1)                            # flatten(1, -1)
    return out, fmap


def init_multi_resolution_discriminator(key, resolutions, channels=64, in_channels=1):
    params = []
    for _ in resolutions:
        key, sub = jax.random.split(key)
        params.append(init_discriminator_r(sub, channels=channels,
                                           in_channels=in_channels))
    return params


def multi_resolution_discriminator_forward(params, resolutions, y, y_hat,
                                           lrelu_slope=0.1,
                                           compute_dtype=jnp.bfloat16):
    """Runs y and y_hat through each DiscriminatorR in a single batched pass."""
    B = y.shape[0]
    yy = jnp.concatenate([y, y_hat], axis=0)                   # (2B, 1, T)
    y_d_rs, y_d_gs, fmap_rs, fmap_gs = [], [], [], []
    for p, r in zip(params, resolutions):
        out, fmap = discriminator_r_forward(p, r, yy, lrelu_slope, compute_dtype)
        y_d_rs.append(out[:B])
        y_d_gs.append(out[B:])
        fmap_rs.append([f[:B] for f in fmap])
        fmap_gs.append([f[B:] for f in fmap])
    return y_d_rs, y_d_gs, fmap_rs, fmap_gs


# ----------------------------------------------------------------------------
# Pure-JAX reference (for sanity check)
# ----------------------------------------------------------------------------
def _ref_discriminator_r(params, resolution, x, lrelu_slope=0.1):
    n_fft, hop, win = resolution
    xs = x[:, 0, :]
    pad = n_fft // 2
    xp = jnp.pad(xs, ((0, 0), (pad, pad)), mode="reflect")
    n_frames = 1 + (xp.shape[1] - n_fft) // hop
    idx = np.arange(n_frames)[:, None] * hop + np.arange(n_fft)[None, :]
    frames = xp[:, idx]
    window = np.zeros(n_fft, np.float32)
    lo = (n_fft - win) // 2
    window[lo:lo + win] = 1.0
    spec = jnp.abs(jnp.fft.rfft(frames * window, n=n_fft, axis=-1)).astype(jnp.float32)
    h = spec.transpose(0, 2, 1)[:, None]
    fmap = []
    for (w, b, s, p) in params["convs"]:
        h = lax.conv_general_dilated(h, w, window_strides=s,
                                     padding=[(p[0], p[0]), (p[1], p[1])],
                                     dimension_numbers=("NCHW", "OIHW", "NCHW"))
        h = h + b[None, :, None, None]
        h = jnp.where(h >= 0, h, h * lrelu_slope)
        fmap.append(h)
    w, b, s, p = params["conv_post"]
    h = lax.conv_general_dilated(h, w, window_strides=s,
                                 padding=[(p[0], p[0]), (p[1], p[1])],
                                 dimension_numbers=("NCHW", "OIHW", "NCHW"))
    h = h + b[None, :, None, None]
    fmap.append(h)
    return h.reshape(h.shape[0], -1), fmap


def _rel_l2(got, want):
    g = np.asarray(jnp.asarray(got, jnp.float32), np.float64)
    w = np.asarray(jnp.asarray(want, jnp.float32), np.float64)
    return float(np.linalg.norm(g - w) / (np.linalg.norm(w) + 1e-12))


# ----------------------------------------------------------------------------
if __name__ == "__main__":
    B, T = 2, 256
    resolutions = ((32, 8, 32), (64, 16, 64))   # small (n_fft, hop, win) configs
    channels = 16

    key = jax.random.PRNGKey(0)
    key, ykey, gkey, pkey = jax.random.split(key, 4)
    y = jax.random.normal(ykey, (B, 1, T), jnp.float32)
    y_hat = jax.random.normal(gkey, (B, 1, T), jnp.float32)
    params = init_multi_resolution_discriminator(pkey, resolutions, channels=channels)

    # f32 kernels: structural / semantic check at tight tolerance.
    res_f32 = multi_resolution_discriminator_forward(
        params, resolutions, y, y_hat, compute_dtype=jnp.float32)
    res_f32 = jax.block_until_ready(res_f32)

    # bf16 fast path (default): checked with a loose relative-L2 bound.
    res_bf16 = multi_resolution_discriminator_forward(
        params, resolutions, y, y_hat, compute_dtype=jnp.bfloat16)
    res_bf16 = jax.block_until_ready(res_bf16)

    for di, r in enumerate(resolutions):
        ref_out_r, ref_fmap_r = _ref_discriminator_r(params[di], r, y)
        ref_out_g, ref_fmap_g = _ref_discriminator_r(params[di], r, y_hat)

        # --- f32 path, tight ---
        np.testing.assert_allclose(np.asarray(res_f32[0][di]), np.asarray(ref_out_r),
                                   rtol=1e-3, atol=1e-3)
        np.testing.assert_allclose(np.asarray(res_f32[1][di]), np.asarray(ref_out_g),
                                   rtol=1e-3, atol=1e-3)
        for a, bref in zip(res_f32[2][di], ref_fmap_r):
            assert a.shape == bref.shape
            np.testing.assert_allclose(np.asarray(a), np.asarray(bref),
                                       rtol=1e-3, atol=1e-3)
        for a, bref in zip(res_f32[3][di], ref_fmap_g):
            assert a.shape == bref.shape
            np.testing.assert_allclose(np.asarray(a), np.asarray(bref),
                                       rtol=1e-3, atol=1e-3)

        # --- bf16 path, loose relative-L2 ---
        assert _rel_l2(res_bf16[0][di], ref_out_r) < 5e-2
        assert _rel_l2(res_bf16[1][di], ref_out_g) < 5e-2
        for a, bref in zip(res_bf16[2][di], ref_fmap_r):
            assert a.shape == bref.shape
            assert _rel_l2(a, bref) < 5e-2
        for a, bref in zip(res_bf16[3][di], ref_fmap_g):
            assert a.shape == bref.shape
            assert _rel_l2(a, bref) < 5e-2

    print("KERNEL_OK")
</pallas_src>

<mosaic_0001>
module attributes {stable_mosaic.version = 11 : i64} {
  func.func @_stft_mag_kernel(%arg0: i32, %arg1: memref<1x8x36xf32, #tpu.memory_space<vmem>>, %arg2: memref<4x48x8xf32, #tpu.memory_space<vmem>>, %arg3: memref<1x17x33xf32, #tpu.memory_space<vmem>>) attributes {dimension_semantics = [#tpu.dimension_semantics<parallel>], iteration_bounds = array<i64: 4>, scalar_prefetch = 0 : i64, scratch_operands = 0 : i64, tpu.core_type = #tpu.core_type<tc>, window_params = [{transform_indices = @transform_0, window_bounds = array<i64: 1, 8, 36>}, {pipeline_mode = #tpu.pipeline_mode<synchronous>, transform_indices = @transform_1, window_bounds = array<i64: 4, 48, 8>}, {transform_indices = @transform_2, window_bounds = array<i64: 1, 17, 33>}]} {
    %cst = arith.constant 0.000000e+00 : f32
    %0 = vector.broadcast %cst : f32 to vector<48x33xf32>
    %c0 = arith.constant 0 : index
    %c0_0 = arith.constant 0 : index
    %c0_1 = arith.constant 0 : index
    %1 = vector.load %arg1[%c0, %c0_0, %c0_1] : memref<1x8x36xf32, #tpu.memory_space<vmem>>, vector<1x8x33xf32>
    %2 = vector.shape_cast %1 : vector<1x8x33xf32> to vector<8x33xf32>
    %c0_2 = arith.constant 0 : index
    %c0_3 = arith.constant 0 : index
    %c0_4 = arith.constant 0 : index
    %3 = vector.load %arg2[%c0_2, %c0_3, %c0_4] : memref<4x48x8xf32, #tpu.memory_space<vmem>>, vector<1x48x8xf32>
    %4 = vector.shape_cast %3 : vector<1x48x8xf32> to vector<48x8xf32>
    %cst_5 = arith.constant dense<0.000000e+00> : vector<48x33xf32>
    %5 = tpu.matmul %4, %2, %cst_5 {dimension_numbers = #tpu.dot_dimension_numbers<[1], [0], [0], [1], [0, 0, 1, 1], [], []>} : vector<48x8xf32>, vector<8x33xf32>, vector<48x33xf32> -> vector<48x33xf32>
    %6 = arith.addf %0, %5 : vector<48x33xf32>
    %c0_6 = arith.constant 0 : index
    %c0_7 = arith.constant 0 : index
    %c1 = arith.constant 1 : index
    %7 = vector.load %arg1[%c0_6, %c0_7, %c1] : memref<1x8x36xf32, #tpu.memory_space<vmem>>, vector<1x8x33xf32>
    %8 = vector.shape_cast %7 : vector<1x8x33xf32> to vector<8x33xf32>
    %c1_8 = arith.constant 1 : index
    %c0_9 = arith.constant 0 : index
    %c0_10 = arith.constant 0 : index
    %9 = vector.load %arg2[%c1_8, %c0_9, %c0_10] : memref<4x48x8xf32, #tpu.memory_space<vmem>>, vector<1x48x8xf32>
    %10 = vector.shape_cast %9 : vector<1x48x8xf32> to vector<48x8xf32>
    %cst_11 = arith.constant dense<0.000000e+00> : vector<48x33xf32>
    %11 = tpu.matmul %10, %8, %cst_11 {dimension_numbers = #tpu.dot_dimension_numbers<[1], [0], [0], [1], [0, 0, 1, 1], [], []>} : vector<48x8xf32>, vector<8x33xf32>, vector<48x33xf32> -> vector<48x33xf32>
    %12 = arith.addf %6, %11 : vector<48x33xf32>
    %c0_12 = arith.constant 0 : index
    %c0_13 = arith.constant 0 : index
    %c2 = arith.constant 2 : index
    %13 = vector.load %arg1[%c0_12, %c0_13, %c2] : memref<1x8x36xf32, #tpu.memory_space<vmem>>, vector<1x8x33xf32>
    %14 = vector.shape_cast %13 : vector<1x8x33xf32> to vector<8x33xf32>
    %c2_14 = arith.constant 2 : index
    %c0_15 = arith.constant 0 : index
    %c0_16 = arith.constant 0 : index
    %15 = vector.load %arg2[%c2_14, %c0_15, %c0_16] : memref<4x48x8xf32, #tpu.memory_space<vmem>>, vector<1x48x8xf32>
    %16 = vector.shape_cast %15 : vector<1x48x8xf32> to vector<48x8xf32>
    %cst_17 = arith.constant dense<0.000000e+00> : vector<48x33xf32>
    %17 = tpu.matmul %16, %14, %cst_17 {dimension_numbers = #tpu.dot_dimension_numbers<[1], [0], [0], [1], [0, 0, 1, 1], [], []>} : vector<48x8xf32>, vector<8x33xf32>, vector<48x33xf32> -> vector<48x33xf32>
    %18 = arith.addf %12, %17 : vector<48x33xf32>
    %c0_18 = arith.constant 0 : index
    %c0_19 = arith.constant 0 : index
    %c3 = arith.constant 3 : index
    %19 = vector.load %arg1[%c0_18, %c0_19, %c3] : memref<1x8x36xf32, #tpu.memory_space<vmem>>, vector<1x8x33xf32>
    %20 = vector.shape_cast %19 : vector<1x8x33xf32> to vector<8x33xf32>
    %c3_20 = arith.constant 3 : index
    %c0_21 = arith.constant 0 : index
    %c0_22 = arith.constant 0 : index
    %21 = vector.load %arg2[%c3_20, %c0_21, %c0_22] : memref<4x48x8xf32, #tpu.memory_space<vmem>>, vector<1x48x8xf32>
    %22 = vector.shape_cast %21 : vector<1x48x8xf32> to vector<48x8xf32>
    %cst_23 = arith.constant dense<0.000000e+00> : vector<48x33xf32>
    %23 = tpu.matmul %22, %20, %cst_23 {dimension_numbers = #tpu.dot_dimension_numbers<[1], [0], [0], [1], [0, 0, 1, 1], [], []>} : vector<48x8xf32>, vector<8x33xf32>, vector<48x33xf32> -> vector<48x33xf32>
    %24 = arith.addf %18, %23 : vector<48x33xf32>
    %25 = vector.extract_strided_slice %24 {offsets = [0, 0], sizes = [24, 33], strides = [1, 1]} : vector<48x33xf32> to vector<24x33xf32>
    %26 = vector.extract_strided_slice %24 {offsets = [24, 0], sizes = [24, 33], strides = [1, 1]} : vector<48x33xf32> to vector<24x33xf32>
    %27 = arith.mulf %25, %25 : vector<24x33xf32>
    %28 = arith.mulf %26, %26 : vector<24x33xf32>
    %29 = arith.addf %27, %28 : vector<24x33xf32>
    %30 = math.sqrt %29 : vector<24x33xf32>
    %31 = vector.extract_strided_slice %30 {offsets = [0, 0], sizes = [17, 33], strides = [1, 1]} : vector<24x33xf32> to vector<17x33xf32>
    %c0_24 = arith.constant 0 : index
    %c0_25 = arith.constant 0 : index
    %c0_26 = arith.constant 0 : index
    %32 = vector.load %arg3[%c0_24, %c0_25, %c0_26] : memref<1x17x33xf32, #tpu.memory_space<vmem>>, vector<1x17x33xf32>
    %33 = vector.shape_cast %32 : vector<1x17x33xf32> to vector<17x33xf32>
    %34 = vector.shape_cast %31 : vector<17x33xf32> to vector<1x17x33xf32>
    tpu.vector_store %arg3[%c0_24, %c0_25, %c0_26], %34 {strides = array<i32>} : memref<1x17x33xf32, #tpu.memory_space<vmem>>, vector<1x17x33xf32>,
    return
  }
  func.func @transform_0(%arg0: i32) -> (i32, i32, i32) {
    %c0_i32 = arith.constant 0 : i32
    %c0_i32_0 = arith.constant 0 : i32
    %c0_i32_1 = arith.constant 0 : i32
    return %arg0, %c0_i32, %c0_i32_0 : i32, i32, i32
  }
  func.func @transform_1(%arg0: i32) -> (i32, i32, i32) {
    %c0_i32 = arith.constant 0 : i32
    %c0_i32_0 = arith.constant 0 : i32
    %c0_i32_1 = arith.constant 0 : i32
    %c0_i32_2 = arith.constant 0 : i32
    return %c0_i32, %c0_i32_0, %c0_i32_1 : i32, i32, i32
  }
  func.func @transform_2(%arg0: i32) -> (i32, i32, i32) {
    %c0_i32 = arith.constant 0 : i32
    %c0_i32_0 = arith.constant 0 : i32
    %c0_i32_1 = arith.constant 0 : i32
    return %arg0, %c0_i32, %c0_i32_0 : i32, i32, i32
  }
}

</mosaic_0001>

<llo_original>
// kernel: tpu_custom_call.1
$region0: #{tpu_custom_call.1}
  #allocation0 [shape = 'u32[]', space=smem, size = 0x4, offset = 0x4, fixed_abs, tag = 'smem constant byte address 0x4 - core index']
  #allocation1 [shape = 'u32[144,128]{1,0:T(1,128)}', space=vmem, size = 0x12000, scoped, tag = 'internal scratch']
  %s0 = inlined_call_operand.vmem [shape: f32[4,8,36], index: 0, kind: input, shape index: {}]
  %s1 = inlined_call_operand.vmem [shape: f32[4,48,8], index: 1, kind: input, shape index: {}]
  %s2 = inlined_call_operand.vmem [shape: f32[4,17,33], index: 2, kind: output, shape index: {}]
  %s3 = sld [smem:[#allocation0]]
  $region41: #{tpu_custom_call.1} parent=0
    _
  %s5 = ssub.s32 1, %s3
  %s6 = scalar_select 0, %s5, %s3
  loop: start=0, step=1, limit=6
  $region2: #{tpu_custom_call.1} parent=0 // loop_pre_header
    _
  $region3: #{tpu_custom_call.1} parent=0 // loop_header
    %s8 = sphi 0, %s12
    %p9 = scmp.ge.s32.totalorder %s8, 6
    %s18 = sphi 0, %s20
    %s21 = sphi 0, %s18
    %s22 = sphi 0, %s21
    %s38 = sphi 0, %s22
    %s42 = sphi 0, %s42
    %s44 = sphi 0, %s42
    %s45 = sphi 0, %s44
    %s59 = sphi 0, %s45
    %s65 = sphi 0, %s67
    %s68 = sphi 0, %s65
    %s69 = sphi 0, %s68
    %s85 = sphi 0, %s69
  $region4: #{tpu_custom_call.1} parent=0 // loop_header_branch
    %11 = sbr.rel (%p9) target = $region8
  $region5: #{tpu_custom_call.1} parent=0 // loop_body
    %s13 = ssub.s32 %s8, 1
    %s14 = ssub.s32 %s8, 2
    %s15 = sadd.s32 %s8, 1
    %s16 = ssub.s32 %s8, %s15
    %p17 = scmp.eq.s32.totalorder %s16, 0
    %s19 = sadd.s32 %s18, 1
    %s20 = scalar_select %p17, %s18, %s19
    %p23 = pneg %p17
    %p24 = scmp.eq.s32.totalorder %s8, 3
    %p25 = por %p23, %p24
    %p26 = scmp.ne.s32.totalorder %s18, %s21
    %p27 = scmp.eq.s32.totalorder %s8, 0
    %p28 = por %p26, %p27
    %p29 = scmp.ne.s32.totalorder %s18, %s21
    %p30 = scmp.eq.s32.totalorder %s13, 3
    %p31 = por %p29, %p30
    %p32 = scmp.ne.s32.totalorder %s21, %s22
    %p33 = scmp.eq.s32.totalorder %s13, 0
    %p34 = por %p32, %p33
    %p35 = scmp.ne.s32.totalorder %s21, %s22
    %p36 = scmp.eq.s32.totalorder %s14, 3
    %p37 = por %p35, %p36
    %p39 = scmp.ne.s32.totalorder %s22, %s38
    %p40 = scmp.eq.s32.totalorder %s14, 0
    %p41 = por %p39, %p40
    %s43 = sadd.s32 %s42, 1
    %p46 = scmp.eq.s32.totalorder %s8, 3
    %p47 = scmp.ne.s32.totalorder %s42, %s44
    %p48 = scmp.eq.s32.totalorder %s8, 0
    %p49 = por %p47, %p48
    %p50 = scmp.ne.s32.totalorder %s42, %s44
    %p51 = scmp.eq.s32.totalorder %s13, 3
    %p52 = por %p50, %p51
    %p53 = scmp.ne.s32.totalorder %s44, %s45
    %p54 = scmp.eq.s32.totalorder %s13, 0
    %p55 = por %p53, %p54
    %p56 = scmp.ne.s32.totalorder %s44, %s45
    %p57 = scmp.eq.s32.totalorder %s14, 3
    %p58 = por %p56, %p57
    %p60 = scmp.ne.s32.totalorder %s45, %s59
    %p61 = scmp.eq.s32.totalorder %s14, 0
    %p62 = por %p60, %p61
    %s63 = ssub.s32 %s8, %s15
    %p64 = scmp.eq.s32.totalorder %s63, 0
    %s66 = sadd.s32 %s65, 1
    %s67 = scalar_select %p64, %s65, %s66
    %p70 = pneg %p64
    %p71 = scmp.eq.s32.totalorder %s8, 3
    %p72 = por %p70, %p71
    %p73 = scmp.ne.s32.totalorder %s65, %s68
    %p74 = scmp.eq.s32.totalorder %s8, 0
    %p75 = por %p73, %p74
    %p76 = scmp.ne.s32.totalorder %s65, %s68
    %p77 = scmp.eq.s32.totalorder %s13, 3
    %p78 = por %p76, %p77
    %p79 = scmp.ne.s32.totalorder %s68, %s69
    %p80 = scmp.eq.s32.totalorder %s13, 0
    %p81 = por %p79, %p80
    %p82 = scmp.ne.s32.totalorder %s68, %s69
    %p83 = scmp.eq.s32.totalorder %s14, 3
    %p84 = por %p82, %p83
    %p86 = scmp.ne.s32.totalorder %s69, %s85
    %p87 = scmp.eq.s32.totalorder %s14, 0
    %p88 = por %p86, %p87
    %p89 = scmp.le.s32.totalorder 1, %s8
    %p90 = scmp.lt.s32.totalorder %s8, 5
    %p91 = pnand %p89, %p90
    %p92 = pneg %p91
    // Predicated region
    $region9: #{tpu_custom_call.1} parent=5 // pred_check
      _
    $region10: #{tpu_custom_call.1} parent=5 // pred_check_branch
      %94 = sbr.rel (%p91) target = $region12
    $region11: #{tpu_custom_call.1} parent=5 // pred_region
      %s95 = ssub.s32 %s8, 1
      // Predicated region
      $region13: #{tpu_custom_call.1} parent=11 // pred_check
        %p96 = pneg %p55
      $region14: #{tpu_custom_call.1} parent=11 // pred_check_branch
        %98 = sbr.rel (%p96) target = $region16
      $region15: #{tpu_custom_call.1} parent=11 // pred_region
        _
      $region16: #{tpu_custom_call.1} parent=11 // pred_fallthru
        _
    $region12: #{tpu_custom_call.1} parent=5 // pred_fallthru
      _
    %p99 = scmp.lt.s32.totalorder %s8, 4
    // Predicated region
    $region17: #{tpu_custom_call.1} parent=5 // pred_check
      %p100 = pneg %p99
    $region18: #{tpu_custom_call.1} parent=5 // pred_check_branch
      %102 = sbr.rel (%p100) target = $region20
    $region19: #{tpu_custom_call.1} parent=5 // pred_region
      // Predicated region
      $region21: #{tpu_custom_call.1} parent=19 // pred_check
        %p103 = pneg %p28
      $region22: #{tpu_custom_call.1} parent=19 // pred_check_branch
        %105 = sbr.rel (%p103) target = $region24
      $region23: #{tpu_custom_call.1} parent=19 // pred_region
        %p106 = scmp.lt.s32.totalorder %s8, 3
        %s107 = scalar_select %p106, %s8, 3
        %s108 = smul.addr %s107, 8
        %s109 = scalar_lea.vmem %s0, %s108
      $region24: #{tpu_custom_call.1} parent=19 // pred_fallthru
        _
    $region20: #{tpu_custom_call.1} parent=5 // pred_fallthru
      _
    %p110 = scmp.le.s32.totalorder 1, %s8
    %p111 = scmp.lt.s32.totalorder %s8, 5
    %p112 = pnand %p110, %p111
    %p113 = pneg %p112
    // Predicated region
    $region25: #{tpu_custom_call.1} parent=5 // pred_check
      _
    $region26: #{tpu_custom_call.1} parent=5 // pred_check_branch
      %115 = sbr.rel (%p112) target = $region28
    $region27: #{tpu_custom_call.1} parent=5 // pred_region
      %s116 = ssub.s32 %s8, 1
      %p117 = scmp.lt.s32.totalorder %s13, 3
      %s118 = scalar_select %p117, %s13, 3
      %s119 = smul.addr %s118, 8
      %s120 = scalar_lea.vmem %s0, %s119
      %p121 = pneg %p34
      %p122 = pneg %p31
      %p123 = pneg %p55
      %p124 = pneg %p52
      %p125 = pneg %p81
      %p126 = pneg %p78
      %p127 = scmp.lt.s32.totalorder %s13, 3
      %s128 = scalar_select %p127, %s13, 3
      %s129 = smul.addr %s128, 3
      %s130 = smul.addr %s129, 8
      %s131 = scalar_lea.vmem %s2, %s130
      %p132 = scmp.lt.s32.totalorder %s13, 3
      %s133 = scalar_select %p132, %s13, 3
      %s134 = smul.addr %s133, 8
      %s135 = scalar_lea.vmem %s0, %s134
      %p136 = scmp.lt.s32.totalorder %s13, 3
      %s137 = scalar_select %p136, %s13, 3
      %s138 = smul.addr %s137, 3
      %s139 = smul.addr %s138, 8
      %s140 = scalar_lea.vmem %s2, %s139
      %v141 = vld [vmem:[%s135] sm:$0xff]
      %v142 = vld [vmem:[%s1] sm:$0xff]
      %v143 = vld [vmem:[%s1 + $0x8] sm:$0xff]
      %v144 = vld [vmem:[%s1 + $0x10] sm:$0xff]
      %v145 = vld [vmem:[%s1 + $0x18] sm:$0xff]
      %v146 = vld [vmem:[%s1 + $0x20] sm:$0xff]
      %v147 = vld [vmem:[%s1 + $0x28] sm:$0xff]
      %s148 = scalar_lea.vmem %s1, 48
      %v149 = vld [vmem:[%s148] sm:$0xff]
      %v150 = vld [vmem:[%s148 + $0x8] sm:$0xff]
      %v151 = vld [vmem:[%s148 + $0x10] sm:$0xff]
      %v152 = vld [vmem:[%s148 + $0x18] sm:$0xff]
      %v153 = vld [vmem:[%s148 + $0x20] sm:$0xff]
      %v154 = vld [vmem:[%s148 + $0x28] sm:$0xff]
      %156 = vrot.lane.b32.xlu0 %v141, 127
      %v157 = vpop.permute.xlu0 %156
      %vm159 = vcmask 64512
      %v161 = vsel %vm159, %v149, 0
      %v164 = vsel %vm159, %v150, 0
      %v167 = vsel %vm159, %v151, 0
      %v170 = vsel %vm159, %v152, 0
      %v173 = vsel %vm159, %v153, 0
      %v176 = vsel %vm159, %v154, 0
      %178 = vmatprep.subr.mxu0 0.0
      %179 = vmatpush1.msra.mxu0 %v157
      %180 = vmatprep.subr.mxu0 0.0
      %181 = vmatpush1.msra.mxu0 0.0
      %182 = vmatprep.subr.mxu0 0.0
      %183 = vmatpush1.msra.mxu0 0.0
      %184 = vmatprep.subr.mxu0 0.0
      %185 = vmatpush1.msra.mxu0 0.0
      %186 = vmatprep.subr.mxu0 0.0
      %187 = vmatpush1.msra.mxu0 0.0
      %188 = vmatprep.subr.mxu0 0.0
      %189 = vmatpush1.msra.mxu0 0.0
      %190 = vmatprep.subr.mxu0 0.0
      %191 = vmatpush1.msra.mxu0 0.0
      %192 = vmatprep.subr.mxu0 0.0
      %193 = vmatpush1.msra.mxu0 0.0
      %194 = vmatprep.subr.mxu0 0.0
      %195 = vmatpush1.msra.mxu0 0.0
      %196 = vmatprep.subr.mxu0 0.0
      %197 = vmatpush1.msra.mxu0 0.0
      %198 = vmatprep.subr.mxu0 0.0
      %199 = vmatpush1.msra.mxu0 0.0
      %200 = vmatprep.subr.mxu0 0.0
      %201 = vmatpush1.msra.mxu0 0.0
      %202 = vmatprep.subr.mxu0 0.0
      %203 = vmatpush1.msra.mxu0 0.0
      %204 = vmatprep.subr.mxu0 0.0
      %205 = vmatpush1.msra.mxu0 0.0
      %206 = vmatprep.subr.mxu0 0.0
      %207 = vmatpush1.msra.mxu0 0.0
      %208 = vmatprep.subr.mxu0 0.0
      %209 = vmatpush1.msra.mxu0 0.0
      %210 = vmatprep.subr.mxu0 0.0
      %211 = vmatpush1.msra.mxu0 0.0
      %212 = vmatprep.subr.mxu0 0.0
      %213 = vmatpush1.msra.mxu0 0.0
      %214 = vmatprep.subr.mxu0 0.0
      %215 = vmatpush1.msra.mxu0 0.0
      %216 = vmatprep.subr.mxu0 0.0
      %217 = vmatpush1.msra.mxu0 0.0
      %218 = vmatprep.subr.mxu0 0.0
      %219 = vmatpush1.msra.mxu0 0.0
      %220 = vmatprep.subr.mxu0 0.0
      %221 = vmatpush1.msra.mxu0 0.0
      %222 = vmatprep.subr.mxu0 0.0
      %223 = vmatpush1.msra.mxu0 0.0
      %224 = vmatprep.subr.mxu0 0.0
      %225 = vmatpush1.msra.mxu0 0.0
      %226 = vmatprep.subr.mxu0 0.0
      %227 = vmatpush1.msra.mxu0 0.0
      %228 = vmatprep.subr.mxu0 0.0
      %229 = vmatpush1.msra.mxu0 0.0
      %230 = vmatprep.subr.mxu0 0.0
      %231 = vmatpush1.msra.mxu0 0.0
      %232 = vmatprep.subr.mxu0 0.0
      %233 = vmatpush1.msra.mxu0 0.0
      %234 = vmatprep.subr.mxu0 0.0
      %235 = vmatpush1.msra.mxu0 0.0
      %236 = vmatprep.subr.mxu0 0.0
      %237 = vmatpush1.msra.mxu0 0.0
      %238 = vmatprep.subr.mxu0 0.0
      %239 = vmatpush1.msra.mxu0 0.0
      %240 = vmatprep.subr.mxu0 0.0
      %241 = vmatpush1.msra.mxu0 0.0
      %242 = vmatprep.mubr.f32.mxu0 0.0
      %243 = vmatmul.mubr.f32.gmra.mrb[0].mxu0 %v161
      %v244 = vpop.f32.mrb[0].mxu0
      %v245 = vadd.f32 0.0, %v244
      %v246 = vpop.f32.mrb[0].mxu0
      %247 = vmatprep.mubr.f32.mxu0 0.0
      %248 = vmatmul.mubr.f32.gmra.mrb[0].mxu0 %v164
      %v249 = vpop.f32.mrb[0].mxu0
      %v250 = vadd.f32 0.0, %v249
      %v251 = vpop.f32.mrb[0].mxu0
      %252 = vmatprep.mubr.f32.mxu0 0.0
      %253 = vmatmul.mubr.f32.gmra.mrb[0].mxu0 %v167
      %v254 = vpop.f32.mrb[0].mxu0
      %v255 = vadd.f32 0.0, %v254
      %v256 = vpop.f32.mrb[0].mxu0
      %257 = vmatprep.mubr.f32.mxu0 0.0
      %258 = vmatmul.mubr.f32.gmra.mrb[0].mxu0 %v170
      %v259 = vpop.f32.mrb[0].mxu0
      %v260 = vadd.f32 0.0, %v259
      %v261 = vpop.f32.mrb[0].mxu0
      %262 = vmatprep.mubr.f32.mxu0 0.0
      %263 = vmatmul.mubr.f32.gmra.mrb[0].mxu0 %v173
      %v264 = vpop.f32.mrb[0].mxu0
      %v265 = vadd.f32 0.0, %v264
      %v266 = vpop.f32.mrb[0].mxu0
      %267 = vmatprep.mubr.f32.mxu0 0.0
      %268 = vmatmul.mubr.f32.gmra.mrb[0].mxu0 %v176
      %v269 = vpop.f32.mrb[0].mxu0
      %v270 = vadd.f32 0.0, %v269
      %v271 = vpop.f32.mrb[0].mxu0
      %272 = vdwg.mxu0
      %v274 = vsel %vm159, %v142, 0
      %v277 = vsel %vm159, %v143, 0
      %v280 = vsel %vm159, %v144, 0
      %v283 = vsel %vm159, %v145, 0
      %v286 = vsel %vm159, %v146, 0
      %v289 = vsel %vm159, %v147, 0
      %291 = vmatprep.subr.mxu0 0.0
      %292 = vmatpush1.msra.mxu0 %v141
      %293 = vmatprep.subr.mxu0 0.0
      %294 = vmatpush1.msra.mxu0 0.0
      %295 = vmatprep.subr.mxu0 0.0
      %296 = vmatpush1.msra.mxu0 0.0
      %297 = vmatprep.subr.mxu0 0.0
      %298 = vmatpush1.msra.mxu0 0.0
      %299 = vmatprep.subr.mxu0 0.0
      %300 = vmatpush1.msra.mxu0 0.0
      %301 = vmatprep.subr.mxu0 0.0
      %302 = vmatpush1.msra.mxu0 0.0
      %303 = vmatprep.subr.mxu0 0.0
      %304 = vmatpush1.msra.mxu0 0.0
      %305 = vmatprep.subr.mxu0 0.0
      %306 = vmatpush1.msra.mxu0 0.0
      %307 = vmatprep.subr.mxu0 0.0
      %308 = vmatpush1.msra.mxu0 0.0
      %309 = vmatprep.subr.mxu0 0.0
      %310 = vmatpush1.msra.mxu0 0.0
      %311 = vmatprep.subr.mxu0 0.0
      %312 = vmatpush1.msra.mxu0 0.0
      %313 = vmatprep.subr.mxu0 0.0
      %314 = vmatpush1.msra.mxu0 0.0
      %315 = vmatprep.subr.mxu0 0.0
      %316 = vmatpush1.msra.mxu0 0.0
      %317 = vmatprep.subr.mxu0 0.0
      %318 = vmatpush1.msra.mxu0 0.0
      %319 = vmatprep.subr.mxu0 0.0
      %320 = vmatpush1.msra.mxu0 0.0
      %321 = vmatprep.subr.mxu0 0.0
      %322 = vmatpush1.msra.mxu0 0.0
      %323 = vmatprep.subr.mxu0 0.0
      %324 = vmatpush1.msra.mxu0 0.0
      %325 = vmatprep.subr.mxu0 0.0
      %326 = vmatpush1.msra.mxu0 0.0
      %327 = vmatprep.subr.mxu0 0.0
      %328 = vmatpush1.msra.mxu0 0.0
      %329 = vmatprep.subr.mxu0 0.0
      %330 = vmatpush1.msra.mxu0 0.0
      %331 = vmatprep.subr.mxu0 0.0
      %332 = vmatpush1.msra.mxu0 0.0
      %333 = vmatprep.subr.mxu0 0.0
      %334 = vmatpush1.msra.mxu0 0.0
      %335 = vmatprep.subr.mxu0 0.0
      %336 = vmatpush1.msra.mxu0 0.0
      %337 = vmatprep.subr.mxu0 0.0
      %338 = vmatpush1.msra.mxu0 0.0
      %339 = vmatprep.subr.mxu0 0.0
      %340 = vmatpush1.msra.mxu0 0.0
      %341 = vmatprep.subr.mxu0 0.0
      %342 = vmatpush1.msra.mxu0 0.0
      %343 = vmatprep.subr.mxu0 0.0
      %344 = vmatpush1.msra.mxu0 0.0
      %345 = vmatprep.subr.mxu0 0.0
      %346 = vmatpush1.msra.mxu0 0.0
      %347 = vmatprep.subr.mxu0 0.0
      %348 = vmatpush1.msra.mxu0 0.0
      %349 = vmatprep.subr.mxu0 0.0
      %350 = vmatpush1.msra.mxu0 0.0
      %351 = vmatprep.subr.mxu0 0.0
      %352 = vmatpush1.msra.mxu0 0.0
      %353 = vmatprep.subr.mxu0 0.0
      %354 = vmatpush1.msra.mxu0 0.0
      %355 = vmatprep.mubr.f32.mxu0 0.0
      %356 = vmatmul.mubr.f32.gmra.mrb[0].mxu0 %v274
      %v357 = vpop.f32.mrb[0].mxu0
      %v358 = vadd.f32 %v245, %v357
      %v359 = vpop.f32.mrb[0].mxu0
      %360 = vmatprep.mubr.f32.mxu0 0.0
      %361 = vmatmul.mubr.f32.gmra.mrb[0].mxu0 %v277
      %v362 = vpop.f32.mrb[0].mxu0
      %v363 = vadd.f32 %v250, %v362
      %v364 = vpop.f32.mrb[0].mxu0
      %365 = vmatprep.mubr.f32.mxu0 0.0
      %366 = vmatmul.mubr.f32.gmra.mrb[0].mxu0 %v280
      %v367 = vpop.f32.mrb[0].mxu0
      %v368 = vadd.f32 %v255, %v367
      %v369 = vpop.f32.mrb[0].mxu0
      %370 = vmatprep.mubr.f32.mxu0 0.0
      %371 = vmatmul.mubr.f32.gmra.mrb[0].mxu0 %v283
      %v372 = vpop.f32.mrb[0].mxu0
      %v373 = vadd.f32 %v260, %v372
      %v374 = vpop.f32.mrb[0].mxu0
      %375 = vmatprep.mubr.f32.mxu0 0.0
      %376 = vmatmul.mubr.f32.gmra.mrb[0].mxu0 %v286
      %v377 = vpop.f32.mrb[0].mxu0
      %v378 = vadd.f32 %v265, %v377
      %v379 = vpop.f32.mrb[0].mxu0
      %380 = vmatprep.mubr.f32.mxu0 0.0
      %381 = vmatmul.mubr.f32.gmra.mrb[0].mxu0 %v289
      %v382 = vpop.f32.mrb[0].mxu0
      %v383 = vadd.f32 %v270, %v382
      %v384 = vpop.f32.mrb[0].mxu0
      %385 = vdwg.mxu0
      %s386 = scalar_lea.vmem %s1, 96
      %v387 = vld [vmem:[%s386] sm:$0xff]
      %v388 = vld [vmem:[%s386 + $0x8] sm:$0xff]
      %v389 = vld [vmem:[%s386 + $0x10] sm:$0xff]
      %v390 = vld [vmem:[%s386 + $0x18] sm:$0xff]
      %v391 = vld [vmem:[%s386 + $0x20] sm:$0xff]
      %v392 = vld [vmem:[%s386 + $0x28] sm:$0xff]
      %393 = vrot.lane.b32.xlu0 %v141, 126
      %v394 = vpop.permute.xlu0 %393
      %v397 = vsel %vm159, %v387, 0
      %v400 = vsel %vm159, %v388, 0
      %v403 = vsel %vm159, %v389, 0
      %v406 = vsel %vm159, %v390, 0
      %v409 = vsel %vm159, %v391, 0
      %v412 = vsel %vm159, %v392, 0
      %414 = vmatprep.subr.mxu0 0.0
      %415 = vmatpush1.msra.mxu0 %v394
      %416 = vmatprep.subr.mxu0 0.0
      %417 = vmatpush1.msra.mxu0 0.0
      %418 = vmatprep.subr.mxu0 0.0
      %419 = vmatpush1.msra.mxu0 0.0
      %420 = vmatprep.subr.mxu0 0.0
      %421 = vmatpush1.msra.mxu0 0.0
      %422 = vmatprep.subr.mxu0 0.0
      %423 = vmatpush1.msra.mxu0 0.0
      %424 = vmatprep.subr.mxu0 0.0
      %425 = vmatpush1.msra.mxu0 0.0
      %426 = vmatprep.subr.mxu0 0.0
      %427 = vmatpush1.msra.mxu0 0.0
      %428 = vmatprep.subr.mxu0 0.0
      %429 = vmatpush1.msra.mxu0 0.0
      %430 = vmatprep.subr.mxu0 0.0
      %431 = vmatpush1.msra.mxu0 0.0
      %432 = vmatprep.subr.mxu0 0.0
      %433 = vmatpush1.msra.mxu0 0.0
      %434 = vmatprep.subr.mxu0 0.0
      %435 = vmatpush1.msra.mxu0 0.0
      %436 = vmatprep.subr.mxu0 0.0
      %437 = vmatpush1.msra.mxu0 0.0
      %438 = vmatprep.subr.mxu0 0.0
      %439 = vmatpush1.msra.mxu0 0.0
      %440 = vmatprep.subr.mxu0 0.0
      %441 = vmatpush1.msra.mxu0 0.0
      %442 = vmatprep.subr.mxu0 0.0
      %443 = vmatpush1.msra.mxu0 0.0
      %444 = vmatprep.subr.mxu0 0.0
      %445 = vmatpush1.msra.mxu0 0.0
      %446 = vmatprep.subr.mxu0 0.0
      %447 = vmatpush1.msra.mxu0 0.0
      %448 = vmatprep.subr.mxu0 0.0
      %449 = vmatpush1.msra.mxu0 0.0
      %450 = vmatprep.subr.mxu0 0.0
      %451 = vmatpush1.msra.mxu0 0.0
      %452 = vmatprep.subr.mxu0 0.0
      %453 = vmatpush1.msra.mxu0 0.0
      %454 = vmatprep.subr.mxu0 0.0
      %455 = vmatpush1.msra.mxu0 0.0
      %456 = vmatprep.subr.mxu0 0.0
      %457 = vmatpush1.msra.mxu0 0.0
      %458 = vmatprep.subr.mxu0 0.0
      %459 = vmatpush1.msra.mxu0 0.0
      %460 = vmatprep.subr.mxu0 0.0
      %461 = vmatpush1.msra.mxu0 0.0
      %462 = vmatprep.subr.mxu0 0.0
      %463 = vmatpush1.msra.mxu0 0.0
      %464 = vmatprep.subr.mxu0 0.0
      %465 = vmatpush1.msra.mxu0 0.0
      %466 = vmatprep.subr.mxu0 0.0
      %467 = vmatpush1.msra.mxu0 0.0
      %468 = vmatprep.subr.mxu0 0.0
      %469 = vmatpush1.msra.mxu0 0.0
      %470 = vmatprep.subr.mxu0 0.0
      %471 = vmatpush1.msra.mxu0 0.0
      %472 = vmatprep.subr.mxu0 0.0
      %473 = vmatpush1.msra.mxu0 0.0
      %474 = vmatprep.subr.mxu0 0.0
      %475 = vmatpush1.msra.mxu0 0.0
      %476 = vmatprep.subr.mxu0 0.0
      %477 = vmatpush1.msra.mxu0 0.0
      %478 = vmatprep.mubr.f32.mxu0 0.0
      %479 = vmatmul.mubr.f32.gmra.mrb[0].mxu0 %v397
      %v480 = vpop.f32.mrb[0].mxu0
      %v481 = vadd.f32 0.0, %v480
      %v482 = vpop.f32.mrb[0].mxu0
      %483 = vmatprep.mubr.f32.mxu0 0.0
      %484 = vmatmul.mubr.f32.gmra.mrb[0].mxu0 %v400
      %v485 = vpop.f32.mrb[0].mxu0
      %v486 = vadd.f32 0.0, %v485
      %v487 = vpop.f32.mrb[0].mxu0
      %488 = vmatprep.mubr.f32.mxu0 0.0
      %489 = vmatmul.mubr.f32.gmra.mrb[0].mxu0 %v403
      %v490 = vpop.f32.mrb[0].mxu0
      %v491 = vadd.f32 0.0, %v490
      %v492 = vpop.f32.mrb[0].mxu0
      %493 = vmatprep.mubr.f32.mxu0 0.0
      %494 = vmatmul.mubr.f32.gmra.mrb[0].mxu0 %v406
      %v495 = vpop.f32.mrb[0].mxu0
      %v496 = vadd.f32 0.0, %v495
      %v497 = vpop.f32.mrb[0].mxu0
      %498 = vmatprep.mubr.f32.mxu0 0.0
      %499 = vmatmul.mubr.f32.gmra.mrb[0].mxu0 %v409
      %v500 = vpop.f32.mrb[0].mxu0
      %v501 = vadd.f32 0.0, %v500
      %v502 = vpop.f32.mrb[0].mxu0
      %503 = vmatprep.mubr.f32.mxu0 0.0
      %504 = vmatmul.mubr.f32.gmra.mrb[0].mxu0 %v412
      %v505 = vpop.f32.mrb[0].mxu0
      %v506 = vadd.f32 0.0, %v505
      %v507 = vpop.f32.mrb[0].mxu0
      %508 = vdwg.mxu0
      %v509 = vadd.f32 %v358, %v481
      %v510 = vadd.f32 %v363, %v486
      %v511 = vadd.f32 %v368, %v491
      %v512 = vadd.f32 %v373, %v496
      %v513 = vadd.f32 %v378, %v501
      %v514 = vadd.f32 %v383, %v506
      %s515 = scalar_lea.vmem %s1, 144
      %v516 = vld [vmem:[%s515] sm:$0xff]
      %v517 = vld [vmem:[%s515 + $0x8] sm:$0xff]
      %v518 = vld [vmem:[%s515 + $0x10] sm:$0xff]
      %v519 = vld [vmem:[%s515 + $0x18] sm:$0xff]
      %v520 = vld [vmem:[%s515 + $0x20] sm:$0xff]
      %v521 = vld [vmem:[%s515 + $0x28] sm:$0xff]
      %522 = vrot.lane.b32.xlu0 %v141, 125
      %v523 = vpop.permute.xlu0 %522
      %v526 = vsel %vm159, %v516, 0
      %v529 = vsel %vm159, %v517, 0
      %v532 = vsel %vm159, %v518, 0
      %v535 = vsel %vm159, %v519, 0
      %v538 = vsel %vm159, %v520, 0
      %v541 = vsel %vm159, %v521, 0
      %543 = vmatprep.subr.mxu0 0.0
      %544 = vmatpush1.msra.mxu0 %v523
      %545 = vmatprep.subr.mxu0 0.0
      %546 = vmatpush1.msra.mxu0 0.0
      %547 = vmatprep.subr.mxu0 0.0
      %548 = vmatpush1.msra.mxu0 0.0
      %549 = vmatprep.subr.mxu0 0.0
      %550 = vmatpush1.msra.mxu0 0.0
      %551 = vmatprep.subr.mxu0 0.0
      %552 = vmatpush1.msra.mxu0 0.0
      %553 = vmatprep.subr.mxu0 0.0
      %554 = vmatpush1.msra.mxu0 0.0
      %555 = vmatprep.subr.mxu0 0.0
      %556 = vmatpush1.msra.mxu0 0.0
      %557 = vmatprep.subr.mxu0 0.0
      %558 = vmatpush1.msra.mxu0 0.0
      %559 = vmatprep.subr.mxu0 0.0
      %560 = vmatpush1.msra.mxu0 0.0
      %561 = vmatprep.subr.mxu0 0.0
      %562 = vmatpush1.msra.mxu0 0.0
      %563 = vmatprep.subr.mxu0 0.0
      %564 = vmatpush1.msra.mxu0 0.0
      %565 = vmatprep.subr.mxu0 0.0
      %566 = vmatpush1.msra.mxu0 0.0
      %567 = vmatprep.subr.mxu0 0.0
      %568 = vmatpush1.msra.mxu0 0.0
      %569 = vmatprep.subr.mxu0 0.0
      %570 = vmatpush1.msra.mxu0 0.0
      %571 = vmatprep.subr.mxu0 0.0
      %572 = vmatpush1.msra.mxu0 0.0
      %573 = vmatprep.subr.mxu0 0.0
      %574 = vmatpush1.msra.mxu0 0.0
      %575 = vmatprep.subr.mxu0 0.0
      %576 = vmatpush1.msra.mxu0 0.0
      %577 = vmatprep.subr.mxu0 0.0
      %578 = vmatpush1.msra.mxu0 0.0
      %579 = vmatprep.subr.mxu0 0.0
      %580 = vmatpush1.msra.mxu0 0.0
      %581 = vmatprep.subr.mxu0 0.0
      %582 = vmatpush1.msra.mxu0 0.0
      %583 = vmatprep.subr.mxu0 0.0
      %584 = vmatpush1.msra.mxu0 0.0
      %585 = vmatprep.subr.mxu0 0.0
      %586 = vmatpush1.msra.mxu0 0.0
      %587 = vmatprep.subr.mxu0 0.0
      %588 = vmatpush1.msra.mxu0 0.0
      %589 = vmatprep.subr.mxu0 0.0
      %590 = vmatpush1.msra.mxu0 0.0
      %591 = vmatprep.subr.mxu0 0.0
      %592 = vmatpush1.msra.mxu0 0.0
      %593 = vmatprep.subr.mxu0 0.0
      %594 = vmatpush1.msra.mxu0 0.0
      %595 = vmatprep.subr.mxu0 0.0
      %596 = vmatpush1.msra.mxu0 0.0
      %597 = vmatprep.subr.mxu0 0.0
      %598 = vmatpush1.msra.mxu0 0.0
      %599 = vmatprep.subr.mxu0 0.0
      %600 = vmatpush1.msra.mxu0 0.0
      %601 = vmatprep.subr.mxu0 0.0
      %602 = vmatpush1.msra.mxu0 0.0
      %603 = vmatprep.subr.mxu0 0.0
      %604 = vmatpush1.msra.mxu0 0.0
      %605 = vmatprep.subr.mxu0 0.0
      %606 = vmatpush1.msra.mxu0 0.0
      %607 = vmatprep.mubr.f32.mxu0 0.0
      %608 = vmatmul.mubr.f32.gmra.mrb[0].mxu0 %v526
      %v609 = vpop.f32.mrb[0].mxu0
      %v610 = vadd.f32 0.0, %v609
      %v611 = vpop.f32.mrb[0].mxu0
      %612 = vmatprep.mubr.f32.mxu0 0.0
      %613 = vmatmul.mubr.f32.gmra.mrb[0].mxu0 %v529
      %v614 = vpop.f32.mrb[0].mxu0
      %v615 = vadd.f32 0.0, %v614
      %v616 = vpop.f32.mrb[0].mxu0
      %617 = vmatprep.mubr.f32.mxu0 0.0
      %618 = vmatmul.mubr.f32.gmra.mrb[0].mxu0 %v532
      %v619 = vpop.f32.mrb[0].mxu0
      %v620 = vadd.f32 0.0, %v619
      %v621 = vpop.f32.mrb[0].mxu0
      %622 = vmatprep.mubr.f32.mxu0 0.0
      %623 = vmatmul.mubr.f32.gmra.mrb[0].mxu0 %v535
      %v624 = vpop.f32.mrb[0].mxu0
      %v625 = vadd.f32 0.0, %v624
      %v626 = vpop.f32.mrb[0].mxu0
      %627 = vmatprep.mubr.f32.mxu0 0.0
      %628 = vmatmul.mubr.f32.gmra.mrb[0].mxu0 %v538
      %v629 = vpop.f32.mrb[0].mxu0
      %v630 = vadd.f32 0.0, %v629
      %v631 = vpop.f32.mrb[0].mxu0
      %632 = vmatprep.mubr.f32.mxu0 0.0
      %633 = vmatmul.mubr.f32.gmra.mrb[0].mxu0 %v541
      %v634 = vpop.f32.mrb[0].mxu0
      %v635 = vadd.f32 0.0, %v634
      %v636 = vpop.f32.mrb[0].mxu0
      %637 = vdwg.mxu0
      %v638 = vadd.f32 %v509, %v610
      %v639 = vadd.f32 %v510, %v615
      %v640 = vadd.f32 %v511, %v620
      %v641 = vadd.f32 %v512, %v625
      %v642 = vadd.f32 %v513, %v630
      %v643 = vadd.f32 %v514, %v635
      %v644 = vmul.f32 %v638, %v638
      %v645 = vmul.f32 %v639, %v639
      %v646 = vmul.f32 %v640, %v640
      %v647 = vmul.f32 %v641, %v641
      %v648 = vmul.f32 %v642, %v642
      %v649 = vmul.f32 %v643, %v643
      %v650 = vadd.f32 %v644, %v647
      %v651 = vadd.f32 %v645, %v648
      %v652 = vadd.f32 %v646, %v649
      %v653 = vrsqrt.pop %v650
      %v654 = vmul.f32 %v650, %v653
      %vm655 = vcmp.eq.f32.partialorder %v650, inf
      %v656 = vsel %vm655, %v650, %v654
      %vm657 = vcmp.eq.f32.partialorder %v650, 0.0
      %v658 = vand.u32 %v650, 2147483648
      %v659 = vsel %vm657, %v658, %v656
      %v660 = vrsqrt.pop %v651
      %v661 = vmul.f32 %v651, %v660
      %vm662 = vcmp.eq.f32.partialorder %v651, inf
      %v663 = vsel %vm662, %v651, %v661
      %vm664 = vcmp.eq.f32.partialorder %v651, 0.0
      %v665 = vand.u32 %v651, 2147483648
      %v666 = vsel %vm664, %v665, %v663
      %v667 = vrsqrt.pop %v652
      %v668 = vmul.f32 %v652, %v667
      %vm669 = vcmp.eq.f32.partialorder %v652, inf
      %v670 = vsel %vm669, %v652, %v668
      %vm671 = vcmp.eq.f32.partialorder %v652, 0.0
      %v672 = vand.u32 %v652, 2147483648
      %v673 = vsel %vm671, %v672, %v670
      %vm674 = vcmask 269312
      %675 = vst.msk [vmem:[%s140] sm:$0xff] %vm674, %v659
      %676 = vst.msk [vmem:[%s140 + $0x8] sm:$0xff] %vm674, %v666
      %vm677 = vcmask 262144
      %678 = vst.msk [vmem:[%s140 + $0x10] sm:$0x1] %vm677, %v673
      %p679 = scmp.lt.s32.totalorder %s13, 3
      %s680 = scalar_select %p679, %s13, 3
      %s681 = smul.addr %s680, 3
      %s682 = smul.addr %s681, 8
      %s683 = scalar_lea.vmem %s2, %s682
      // Predicated region
      $region29: #{tpu_custom_call.1} parent=27 // pred_check
        %p684 = pneg %p78
      $region30: #{tpu_custom_call.1} parent=27 // pred_check_branch
        %686 = sbr.rel (%p684) target = $region32
      $region31: #{tpu_custom_call.1} parent=27 // pred_region
        _
      $region32: #{tpu_custom_call.1} parent=27 // pred_fallthru
        _
    $region28: #{tpu_custom_call.1} parent=5 // pred_fallthru
      _
    %p687 = scmp.le.s32.totalorder 2, %s8
    // Predicated region
    $region33: #{tpu_custom_call.1} parent=5 // pred_check
      %p688 = pneg %p687
    $region34: #{tpu_custom_call.1} parent=5 // pred_check_branch
      %690 = sbr.rel (%p688) target = $region36
    $region35: #{tpu_custom_call.1} parent=5 // pred_region
      %s691 = ssub.s32 %s8, 2
      // Predicated region
      $region37: #{tpu_custom_call.1} parent=35 // pred_check
        %p692 = pneg %p84
      $region38: #{tpu_custom_call.1} parent=35 // pred_check_branch
        %694 = sbr.rel (%p692) target = $region40
      $region39: #{tpu_custom_call.1} parent=35 // pred_region
        %p695 = scmp.lt.s32.totalorder %s14, 3
        %s696 = scalar_select %p695, %s14, 3
        %s697 = smul.addr %s696, 3
        %s698 = smul.addr %s697, 8
        %s699 = scalar_lea.vmem %s2, %s698
      $region40: #{tpu_custom_call.1} parent=35 // pred_fallthru
        _
    $region36: #{tpu_custom_call.1} parent=5 // pred_fallthru
      _
  $region6: #{tpu_custom_call.1} parent=0 // loop_footer
    %s12 = sadd.s32 1, %s8
  $region7: #{tpu_custom_call.1} parent=0 // loop_footer_branch
    %7 = sbr.rel target = $region3
  $region8: #{tpu_custom_call.1} parent=0 // loop_exit
    _

</llo_original>
